<compile_context>
chip_gen: v7x
topology: tpu7x:2x2x1
jax: 0.10.0
libtpu: 0.0.40
codegen_flags: <defaults>
</compile_context>

<pallas_src>
import functools

import jax
import jax.numpy as jnp
from jax.experimental import pallas as pl
from jax.experimental.pallas import tpu as pltpu


_MIN_PALLAS_ELEMS = 1 << 16          # below this, launch overhead dwarfs the work -> jnp.tanh
_LANE_CANDIDATES = (512, 256, 128)   # all multiples of 128 -> unmasked full-width vst
_PAD_LANES = 512                     # lane width used for the padded (unaligned) path


def _tanh_kernel(x_ref, o_ref):
    # Elementwise tanh on the VMEM tile; lowers to the EUP tanh unit on TPU.
    o_ref[...] = jnp.tanh(x_ref[...])


@functools.lru_cache(maxsize=None)
def _tpu_config():
    """Returns (target_block_bytes, vmem_limit_bytes), TPU-generation aware."""
    try:
        info = pltpu.get_tpu_info()
        vmem_cap = getattr(info, "vmem_capacity_bytes", None)
        if vmem_cap is not None and vmem_cap >= 96 * 1024 * 1024:
            # v5e / v6e: 128 MiB VMEM per TensorCore -> bigger blocks, more headroom.
            return 8 * 1024 * 1024, 48 * 1024 * 1024
    except Exception:
        pass
    # v7x (64 MiB VMEM per TensorCore) or unknown: conservative settings that are
    # still ~4 MiB blocks (captures nearly all of the per-step-overhead win).
    return 4 * 1024 * 1024, 32 * 1024 * 1024


def _sublane_pack(itemsize: int) -> int:
    # Rows per packed vreg: f32 -> 8, bf16/f16 -> 16 (int8/fp8 would be 32 but
    # only float activations are expected here).
    return max(8, 32 // max(itemsize, 1))


def _choose_block_rows(rows: int, lanes: int, itemsize: int) -> int:
    target_block_bytes, _ = _tpu_config()
    pack = _sublane_pack(itemsize)
    # Rows per block from the byte budget, pack-aligned.
    desired = max(pack, (target_block_bytes // (lanes * itemsize)) // pack * pack)
    # Keep at least ~4 grid steps (>= 2 blocks per TensorCore on v7x) whenever the
    # slab is tall enough, so pipelining and the megacore split stay active.
    cap = max(pack, (rows // 4) // pack * pack)
    return min(desired, cap)


def _pallas_tanh_2d(slab: jax.Array) -> jax.Array:
    rows, lanes = slab.shape
    itemsize = slab.dtype.itemsize
    block_rows = _choose_block_rows(rows, lanes, itemsize)
    _, vmem_limit = _tpu_config()
    n = rows * lanes
    cost = pl.CostEstimate(
        flops=0,
        transcendentals=n,
        bytes_accessed=2 * n * itemsize,
    )
    return pl.pallas_call(
        _tanh_kernel,
        out_shape=jax.ShapeDtypeStruct((rows, lanes), slab.dtype),
        grid_spec=pltpu.PrefetchScalarGridSpec(
            num_scalar_prefetch=0,
            grid=(pl.cdiv(rows, block_rows),),
            in_specs=[pl.BlockSpec((block_rows, lanes), lambda i: (i, 0))],
            out_specs=pl.BlockSpec((block_rows, lanes), lambda i: (i, 0)),
        ),
        compiler_params=pltpu.CompilerParams(
            dimension_semantics=("parallel",),   # lets v7x shard blocks across its 2 TCs
            vmem_limit_bytes=vmem_limit,
        ),
        cost_estimate=cost,
    )(slab)


def pallas_tanh(x: jax.Array) -> jax.Array:
    """Elementwise tanh via a Pallas TPU kernel. Accepts any shape/float dtype."""
    n = x.size
    if n == 0 or n < _MIN_PALLAS_ELEMS:
        # pallas_call fixed launch + reshape overhead dominates at this size.
        return jnp.tanh(x)

    flat = x.reshape(-1)

    # Adaptive lane width: largest of 512/256/128 that divides n gives a zero-copy
    # lane-dense 2D view (no extra HBM passes at all).
    lanes = next((c for c in _LANE_CANDIDATES if n % c == 0), None)

    if lanes is not None:
        slab = flat.reshape(n // lanes, lanes)
        out_flat = _pallas_tanh_2d(slab).reshape(-1)
    else:
        # Truly unaligned size: pad once (single HBM pass, tanh(0)=0 in the tail is
        # discarded) instead of prefix-slice + concatenate (two passes).
        lanes = _PAD_LANES
        n_pad = pl.cdiv(n, lanes) * lanes
        slab = jnp.pad(flat, (0, n_pad - n)).reshape(n_pad // lanes, lanes)
        out_flat = _pallas_tanh_2d(slab).reshape(-1)[:n]

    return out_flat.reshape(x.shape)


class TanhPallas:
    """JAX/Pallas analogue of pytorch_nndct Tanh(approx_mode='no_approx')."""

    def __init__(self, approx_mode="no_approx", approx_degree=3, exp_table_size=1):
        self.approx_mode = approx_mode
        self.approx_degree = approx_degree
        self.exp_table_size = exp_table_size

    def __call__(self, x):
        if self.approx_mode == "no_approx":
            return pallas_tanh(x)
        raise NotImplementedError(
            f"approx_mode {self.approx_mode} is not implemented in TanhPallas"
        )


if __name__ == "__main__":
    key = jax.random.PRNGKey(0)
    k1, k2, k3 = jax.random.split(key, 3)

    mod = TanhPallas(approx_mode="no_approx")

    # Small NCHW activation (small-input fast path, matches the PyTorch module).
    x_small = jax.random.normal(k1, (2, 4, 16, 16), dtype=jnp.float32) * 3.0
    y_small = jax.block_until_ready(mod(x_small))
    assert y_small.shape == x_small.shape and y_small.dtype == x_small.dtype
    assert jnp.max(jnp.abs(y_small - jnp.tanh(x_small))) < 1e-5

    # 512-aligned activation: zero-copy lane-dense slab path through the kernel.
    x_aligned = jax.random.normal(k2, (2, 16, 64, 64), dtype=jnp.float32) * 3.0
    y_aligned = jax.block_until_ready(mod(x_aligned))
    assert y_aligned.shape == x_aligned.shape and y_aligned.dtype == x_aligned.dtype
    assert jnp.max(jnp.abs(y_aligned - jnp.tanh(x_aligned))) < 1e-5

    # Unaligned activation (n % 128 != 0): single-pad path, ragged last row-block.
    x_ragged = jax.random.normal(k3, (2, 16, 63, 65), dtype=jnp.float32) * 3.0
    y_ragged = jax.block_until_ready(mod(x_ragged))
    assert y_ragged.shape == x_ragged.shape and y_ragged.dtype == x_ragged.dtype
    assert jnp.max(jnp.abs(y_ragged - jnp.tanh(x_ragged))) < 1e-5

    print("KERNEL_OK")
</pallas_src>

<mosaic_0001>
module attributes {stable_mosaic.version = 11 : i64} {
  func.func @_tanh_kernel(%arg0: i32, %arg1: memref<64x512xf32, #tpu.memory_space<vmem>>, %arg2: memref<64x512xf32, #tpu.memory_space<vmem>>) attributes {dimension_semantics = [#tpu.dimension_semantics<parallel>], iteration_bounds = array<i64: 4>, scalar_prefetch = 0 : i64, scratch_operands = 0 : i64, tpu.core_type = #tpu.core_type<tc>, window_params = [{transform_indices = @transform_0, window_bounds = array<i64: 64, 512>}, {transform_indices = @transform_1, window_bounds = array<i64: 64, 512>}]} {
    %c0 = arith.constant 0 : index
    %c0_0 = arith.constant 0 : index
    %0 = vector.load %arg1[%c0, %c0_0] : memref<64x512xf32, #tpu.memory_space<vmem>>, vector<64x512xf32>
    %1 = math.tanh %0 : vector<64x512xf32>
    %c0_1 = arith.constant 0 : index
    %c0_2 = arith.constant 0 : index
    %2 = vector.load %arg2[%c0_1, %c0_2] : memref<64x512xf32, #tpu.memory_space<vmem>>, vector<64x512xf32>
    tpu.vector_store %arg2[%c0_1, %c0_2], %1 {strides = array<i32>} : memref<64x512xf32, #tpu.memory_space<vmem>>, vector<64x512xf32>,
    return
  }
  func.func @transform_0(%arg0: i32) -> (i32, i32) {
    %c0_i32 = arith.constant 0 : i32
    %c0_i32_0 = arith.constant 0 : i32
    return %arg0, %c0_i32 : i32, i32
  }
  func.func @transform_1(%arg0: i32) -> (i32, i32) {
    %c0_i32 = arith.constant 0 : i32
    %c0_i32_0 = arith.constant 0 : i32
    return %arg0, %c0_i32 : i32, i32
  }
}

</mosaic_0001>

<llo_original>
// kernel: tpu_custom_call.1
$region0: #{tpu_custom_call.1}
  #allocation0 [shape = 'u32[]', space=smem, size = 0x4, offset = 0x4, fixed_abs, tag = 'smem constant byte address 0x4 - core index']
  #allocation1 [shape = 'u32[144,128]{1,0:T(1,128)}', space=vmem, size = 0x12000, scoped, tag = 'internal scratch']
  %s0 = inlined_call_operand.hbm [shape: f32[256,512], index: 0, kind: input, shape index: {}]
  %s1 = inlined_call_operand.hbm [shape: f32[256,512], index: 1, kind: output, shape index: {}]
  %s2 = sld [smem:[#allocation0]]
  $region41: #{tpu_custom_call.1} parent=0
    _
  %s4 = ssub.s32 1, %s2
  %s5 = scalar_select 0, %s4, %s2
  $region1: #{tpu_custom_call.1} parent=0
    #allocation2 [shape = 'u8[262144]{0}', space=vmem, size = 0x40000, scoped, tag = 'input window, operand 0']
    #allocation3 [shape = 's32[2]{0}', space=sflag, size = 0x8, scoped, tag = 'scoped memory for tpu_custom_call.1']
    #allocation4 [shape = 's32[2]{0}', space=sflag, size = 0x8, scoped, tag = 'scoped memory for tpu_custom_call.1']
    #allocation5 [shape = 'u8[262144]{0}', space=vmem, size = 0x40000, scoped, tag = 'output window, operand 0']
    %6 = vsyncpa [#allocation3], 0
    %s7 = scalar_lea.sflag [#allocation3], 1
    %8 = vsyncpa %s7, 0
    %9 = vsyncpa [#allocation4], 0
    %s10 = scalar_lea.sflag [#allocation4], 1
    %11 = vsyncpa %s10, 0
    loop: start=0, step=1, limit=6
    $region2: #{tpu_custom_call.1} parent=1 // loop_pre_header
      _
    $region3: #{tpu_custom_call.1} parent=1 // loop_header
      %s13 = sphi 0, %s17
      %p14 = scmp.ge.s32.totalorder %s13, 6
      %s23 = sphi 0, %s25
      %s26 = sphi 0, %s23
      %s27 = sphi 0, %s26
      %s43 = sphi 0, %s27
      %s49 = sphi 0, %s51
      %s52 = sphi 0, %s49
      %s53 = sphi 0, %s52
      %s69 = sphi 0, %s53
    $region4: #{tpu_custom_call.1} parent=1 // loop_header_branch
      %16 = sbr.rel (%p14) target = $region8
    $region5: #{tpu_custom_call.1} parent=1 // loop_body
      %s18 = ssub.s32 %s13, 1
      %s19 = ssub.s32 %s13, 2
      %s20 = sadd.s32 %s13, 1
      %s21 = ssub.s32 %s13, %s20
      %p22 = scmp.eq.s32.totalorder %s21, 0
      %s24 = sadd.s32 %s23, 1
      %s25 = scalar_select %p22, %s23, %s24
      %p28 = pneg %p22
      %p29 = scmp.eq.s32.totalorder %s13, 3
      %p30 = por %p28, %p29
      %p31 = scmp.ne.s32.totalorder %s23, %s26
      %p32 = scmp.eq.s32.totalorder %s13, 0
      %p33 = por %p31, %p32
      %p34 = scmp.ne.s32.totalorder %s23, %s26
      %p35 = scmp.eq.s32.totalorder %s18, 3
      %p36 = por %p34, %p35
      %p37 = scmp.ne.s32.totalorder %s26, %s27
      %p38 = scmp.eq.s32.totalorder %s18, 0
      %p39 = por %p37, %p38
      %p40 = scmp.ne.s32.totalorder %s26, %s27
      %p41 = scmp.eq.s32.totalorder %s19, 3
      %p42 = por %p40, %p41
      %p44 = scmp.ne.s32.totalorder %s27, %s43
      %p45 = scmp.eq.s32.totalorder %s19, 0
      %p46 = por %p44, %p45
      %s47 = ssub.s32 %s13, %s20
      %p48 = scmp.eq.s32.totalorder %s47, 0
      %s50 = sadd.s32 %s49, 1
      %s51 = scalar_select %p48, %s49, %s50
      %p54 = pneg %p48
      %p55 = scmp.eq.s32.totalorder %s13, 3
      %p56 = por %p54, %p55
      %p57 = scmp.ne.s32.totalorder %s49, %s52
      %p58 = scmp.eq.s32.totalorder %s13, 0
      %p59 = por %p57, %p58
      %p60 = scmp.ne.s32.totalorder %s49, %s52
      %p61 = scmp.eq.s32.totalorder %s18, 3
      %p62 = por %p60, %p61
      %p63 = scmp.ne.s32.totalorder %s52, %s53
      %p64 = scmp.eq.s32.totalorder %s18, 0
      %p65 = por %p63, %p64
      %p66 = scmp.ne.s32.totalorder %s52, %s53
      %p67 = scmp.eq.s32.totalorder %s19, 3
      %p68 = por %p66, %p67
      %p70 = scmp.ne.s32.totalorder %s53, %s69
      %p71 = scmp.eq.s32.totalorder %s19, 0
      %p72 = por %p70, %p71
      %p73 = scmp.le.s32.totalorder 1, %s13
      %p74 = scmp.lt.s32.totalorder %s13, 5
      %p75 = pnand %p73, %p74
      %p76 = pneg %p75
      // Predicated region
      $region9: #{tpu_custom_call.1} parent=5 // pred_check
        _
      $region10: #{tpu_custom_call.1} parent=5 // pred_check_branch
        %78 = sbr.rel (%p75) target = $region12
      $region11: #{tpu_custom_call.1} parent=5 // pred_region
        %s79 = ssub.s32 %s13, 1
      $region12: #{tpu_custom_call.1} parent=5 // pred_fallthru
        _
      %p80 = scmp.lt.s32.totalorder %s13, 4
      // Predicated region
      $region13: #{tpu_custom_call.1} parent=5 // pred_check
        %p81 = pneg %p80
      $region14: #{tpu_custom_call.1} parent=5 // pred_check_branch
        %83 = sbr.rel (%p81) target = $region16
      $region15: #{tpu_custom_call.1} parent=5 // pred_region
        // Predicated region
        $region17: #{tpu_custom_call.1} parent=15 // pred_check
          %p84 = pneg %p33
        $region18: #{tpu_custom_call.1} parent=15 // pred_check_branch
          %86 = sbr.rel (%p84) target = $region20
        $region19: #{tpu_custom_call.1} parent=15 // pred_region
          %s87 = sand.u32 %s23, 1
          %s88 = scalar_lea.sflag [#allocation3], %s87
          %s89 = sand.u32 %s23, 1
          %s90 = smul.addr %s89, 256
          %s91 = scalar_lea.vmem [#allocation2], %s90
          %s92 = smul.u32 8, %s13
          %s94 = ssub.s32 4096, 4096
          %95 = vsyncadd %s88, %s94
          %s96 = smul.addr %s92, 4
          %s97 = smul.addr %s96, 128
          %s98 = scalar_lea.hbm %s0, %s97
          %s99 = sshll.u32 %s91, 4
          %s100 = int_to_ptr.vmem [resolvable:$true] %s99
          %105 = dma.hbm_to_vmem [thread:$0]  %s98, 4096, %s100, %s88, 512, 512, 32
        $region20: #{tpu_custom_call.1} parent=15 // pred_fallthru
          _
      $region16: #{tpu_custom_call.1} parent=5 // pred_fallthru
        _
      %p106 = scmp.le.s32.totalorder 1, %s13
      %p107 = scmp.lt.s32.totalorder %s13, 5
      %p108 = pnand %p106, %p107
      %p109 = pneg %p108
      // Predicated region
      $region21: #{tpu_custom_call.1} parent=5 // pred_check
        _
      $region22: #{tpu_custom_call.1} parent=5 // pred_check_branch
        %111 = sbr.rel (%p108) target = $region24
      $region23: #{tpu_custom_call.1} parent=5 // pred_region
        %s112 = ssub.s32 %s13, 1
        %s113 = sand.u32 %s26, 1
        %s114 = scalar_lea.sflag [#allocation3], %s113
        %s115 = sand.u32 %s26, 1
        %s116 = smul.addr %s115, 256
        %s117 = scalar_lea.vmem [#allocation2], %s116
        // Predicated region
        $region25: #{tpu_custom_call.1} parent=23 // pred_check
          %p118 = pneg %p39
        $region26: #{tpu_custom_call.1} parent=23 // pred_check_branch
          %120 = sbr.rel (%p118) target = $region28
        $region27: #{tpu_custom_call.1} parent=23 // pred_region
          %121 = dma.done %s114, 4096
        $region28: #{tpu_custom_call.1} parent=23 // pred_fallthru
          _
        %s122 = sand.u32 %s26, 1
        %s123 = scalar_lea.sflag [#allocation3], %s122
        %s124 = sand.u32 %s26, 1
        %s125 = smul.addr %s124, 256
        %s126 = scalar_lea.vmem [#allocation2], %s125
        %p127 = pneg %p39
        %p128 = pneg %p36
        %p129 = pneg %p65
        %p130 = pneg %p62
        %s131 = sand.u32 %s52, 1
        %s132 = scalar_lea.sflag [#allocation4], %s131
        %s133 = sand.u32 %s52, 1
        %s134 = smul.addr %s133, 256
        %s135 = scalar_lea.vmem [#allocation5], %s134
        %s136 = smul.u32 8, %s18
        %s137 = smul.u32 8, %s18
        %v138 = vld [vmem:[%s117] sm:$0xff]
        %v139 = vld [vmem:[%s117 + $0x8] sm:$0xff]
        %v140 = vld [vmem:[%s117 + $0x10] sm:$0xff]
        %v141 = vld [vmem:[%s117 + $0x18] sm:$0xff]
        %v142 = vld [vmem:[%s117 + $0x20] sm:$0xff]
        %v143 = vld [vmem:[%s117 + $0x28] sm:$0xff]
        %v144 = vld [vmem:[%s117 + $0x30] sm:$0xff]
        %v145 = vld [vmem:[%s117 + $0x38] sm:$0xff]
        %v146 = vld [vmem:[%s117 + $0x40] sm:$0xff]
        %v147 = vld [vmem:[%s117 + $0x48] sm:$0xff]
        %v148 = vld [vmem:[%s117 + $0x50] sm:$0xff]
        %v149 = vld [vmem:[%s117 + $0x58] sm:$0xff]
        %v150 = vld [vmem:[%s117 + $0x60] sm:$0xff]
        %v151 = vld [vmem:[%s117 + $0x68] sm:$0xff]
        %v152 = vld [vmem:[%s117 + $0x70] sm:$0xff]
        %v153 = vld [vmem:[%s117 + $0x78] sm:$0xff]
        %v154 = vld [vmem:[%s117 + $0x80] sm:$0xff]
        %v155 = vld [vmem:[%s117 + $0x88] sm:$0xff]
        %v156 = vld [vmem:[%s117 + $0x90] sm:$0xff]
        %v157 = vld [vmem:[%s117 + $0x98] sm:$0xff]
        %v158 = vld [vmem:[%s117 + $0xa0] sm:$0xff]
        %v159 = vld [vmem:[%s117 + $0xa8] sm:$0xff]
        %v160 = vld [vmem:[%s117 + $0xb0] sm:$0xff]
        %v161 = vld [vmem:[%s117 + $0xb8] sm:$0xff]
        %v162 = vld [vmem:[%s117 + $0xc0] sm:$0xff]
        %v163 = vld [vmem:[%s117 + $0xc8] sm:$0xff]
        %v164 = vld [vmem:[%s117 + $0xd0] sm:$0xff]
        %v165 = vld [vmem:[%s117 + $0xd8] sm:$0xff]
        %v166 = vld [vmem:[%s117 + $0xe0] sm:$0xff]
        %v167 = vld [vmem:[%s117 + $0xe8] sm:$0xff]
        %v168 = vld [vmem:[%s117 + $0xf0] sm:$0xff]
        %v169 = vld [vmem:[%s117 + $0xf8] sm:$0xff]
        %v170 = vtanh.pop %v138
        %v171 = vtanh.pop %v139
        %v172 = vtanh.pop %v140
        %v173 = vtanh.pop %v141
        %v174 = vtanh.pop %v142
        %v175 = vtanh.pop %v143
        %v176 = vtanh.pop %v144
        %v177 = vtanh.pop %v145
        %v178 = vtanh.pop %v146
        %v179 = vtanh.pop %v147
        %v180 = vtanh.pop %v148
        %v181 = vtanh.pop %v149
        %v182 = vtanh.pop %v150
        %v183 = vtanh.pop %v151
        %v184 = vtanh.pop %v152
        %v185 = vtanh.pop %v153
        %v186 = vtanh.pop %v154
        %v187 = vtanh.pop %v155
        %v188 = vtanh.pop %v156
        %v189 = vtanh.pop %v157
        %v190 = vtanh.pop %v158
        %v191 = vtanh.pop %v159
        %v192 = vtanh.pop %v160
        %v193 = vtanh.pop %v161
        %v194 = vtanh.pop %v162
        %v195 = vtanh.pop %v163
        %v196 = vtanh.pop %v164
        %v197 = vtanh.pop %v165
        %v198 = vtanh.pop %v166
        %v199 = vtanh.pop %v167
        %v200 = vtanh.pop %v168
        %v201 = vtanh.pop %v169
        %202 = vst [vmem:[%s135] sm:$0xff] %v170
        %203 = vst [vmem:[%s135 + $0x8] sm:$0xff] %v171
        %204 = vst [vmem:[%s135 + $0x10] sm:$0xff] %v172
        %205 = vst [vmem:[%s135 + $0x18] sm:$0xff] %v173
        %206 = vst [vmem:[%s135 + $0x20] sm:$0xff] %v174
        %207 = vst [vmem:[%s135 + $0x28] sm:$0xff] %v175
        %208 = vst [vmem:[%s135 + $0x30] sm:$0xff] %v176
        %209 = vst [vmem:[%s135 + $0x38] sm:$0xff] %v177
        %210 = vst [vmem:[%s135 + $0x40] sm:$0xff] %v178
        %211 = vst [vmem:[%s135 + $0x48] sm:$0xff] %v179
        %212 = vst [vmem:[%s135 + $0x50] sm:$0xff] %v180
        %213 = vst [vmem:[%s135 + $0x58] sm:$0xff] %v181
        %214 = vst [vmem:[%s135 + $0x60] sm:$0xff] %v182
        %215 = vst [vmem:[%s135 + $0x68] sm:$0xff] %v183
        %216 = vst [vmem:[%s135 + $0x70] sm:$0xff] %v184
        %217 = vst [vmem:[%s135 + $0x78] sm:$0xff] %v185
        %218 = vst [vmem:[%s135 + $0x80] sm:$0xff] %v186
        %219 = vst [vmem:[%s135 + $0x88] sm:$0xff] %v187
        %220 = vst [vmem:[%s135 + $0x90] sm:$0xff] %v188
        %221 = vst [vmem:[%s135 + $0x98] sm:$0xff] %v189
        %222 = vst [vmem:[%s135 + $0xa0] sm:$0xff] %v190
        %223 = vst [vmem:[%s135 + $0xa8] sm:$0xff] %v191
        %224 = vst [vmem:[%s135 + $0xb0] sm:$0xff] %v192
        %225 = vst [vmem:[%s135 + $0xb8] sm:$0xff] %v193
        %226 = vst [vmem:[%s135 + $0xc0] sm:$0xff] %v194
        %227 = vst [vmem:[%s135 + $0xc8] sm:$0xff] %v195
        %228 = vst [vmem:[%s135 + $0xd0] sm:$0xff] %v196
        %229 = vst [vmem:[%s135 + $0xd8] sm:$0xff] %v197
        %230 = vst [vmem:[%s135 + $0xe0] sm:$0xff] %v198
        %231 = vst [vmem:[%s135 + $0xe8] sm:$0xff] %v199
        %232 = vst [vmem:[%s135 + $0xf0] sm:$0xff] %v200
        %233 = vst [vmem:[%s135 + $0xf8] sm:$0xff] %v201
        %s234 = sand.u32 %s52, 1
        %s235 = scalar_lea.sflag [#allocation4], %s234
        %s236 = sand.u32 %s52, 1
        %s237 = smul.addr %s236, 256
        %s238 = scalar_lea.vmem [#allocation5], %s237
        // Predicated region
        $region29: #{tpu_custom_call.1} parent=23 // pred_check
          %p239 = pneg %p62
        $region30: #{tpu_custom_call.1} parent=23 // pred_check_branch
          %241 = sbr.rel (%p239) target = $region32
        $region31: #{tpu_custom_call.1} parent=23 // pred_region
          %s242 = smul.u32 8, %s18
          %s244 = ssub.s32 4096, 4096
          %245 = vsyncadd %s235, %s244
          %s246 = smul.addr %s242, 4
          %s247 = smul.addr %s246, 128
          %s248 = scalar_lea.hbm %s1, %s247
          %s249 = sshll.u32 %s238, 4
          %s250 = int_to_ptr.vmem [resolvable:$true] %s249
          %255 = dma.vmem_to_hbm [thread:$0]  %s250, 4096, %s248, %s235, 512, 512, 32
        $region32: #{tpu_custom_call.1} parent=23 // pred_fallthru
          _
      $region24: #{tpu_custom_call.1} parent=5 // pred_fallthru
        _
      %p256 = scmp.le.s32.totalorder 2, %s13
      // Predicated region
      $region33: #{tpu_custom_call.1} parent=5 // pred_check
        %p257 = pneg %p256
      $region34: #{tpu_custom_call.1} parent=5 // pred_check_branch
        %259 = sbr.rel (%p257) target = $region36
      $region35: #{tpu_custom_call.1} parent=5 // pred_region
        %s260 = ssub.s32 %s13, 2
        // Predicated region
        $region37: #{tpu_custom_call.1} parent=35 // pred_check
          %p261 = pneg %p68
        $region38: #{tpu_custom_call.1} parent=35 // pred_check_branch
          %263 = sbr.rel (%p261) target = $region40
        $region39: #{tpu_custom_call.1} parent=35 // pred_region
          %s264 = sand.u32 %s53, 1
          %s265 = scalar_lea.sflag [#allocation4], %s264
          %s266 = sand.u32 %s53, 1
          %s267 = smul.addr %s266, 256
          %s268 = scalar_lea.vmem [#allocation5], %s267
          %269 = dma.done %s265, 4096
        $region40: #{tpu_custom_call.1} parent=35 // pred_fallthru
          _
      $region36: #{tpu_custom_call.1} parent=5 // pred_fallthru
        _
    $region6: #{tpu_custom_call.1} parent=1 // loop_footer
      %s17 = sadd.s32 1, %s13
    $region7: #{tpu_custom_call.1} parent=1 // loop_footer_branch
      %12 = sbr.rel target = $region3
    $region8: #{tpu_custom_call.1} parent=1 // loop_exit
      _
    %270 = vsyncpa [#allocation3], 1
    %s271 = scalar_lea.sflag [#allocation3], 1
    %272 = vsyncpa %s271, 1
    %273 = vsyncpa [#allocation4], 1
    %s274 = scalar_lea.sflag [#allocation4], 1
    %275 = vsyncpa %s274, 1

</llo_original>
